<compile_context>
chip_gen: v6e
topology: v6e:2x2x1
jax: 0.10.0
libtpu: 0.0.40
codegen_flags: <defaults>
</compile_context>

<pallas_src>
import functools
import math

import jax
import jax.numpy as jnp
import numpy as np
from jax.experimental import pallas as pl
from jax.experimental.pallas import tpu as pltpu


# ----------------------------------------------------------------------------
# Pallas kernel: one batch image -> (OC, OH*OWp) output slab, fused activation.
# ----------------------------------------------------------------------------
def _lgn_conv_kernel(x_ref, w_ref, o_ref, *, n_dh, n_dw, gk, owp, oh, activate_fn):
    # x_ref : (s*s*C, HPs*OWp)   phase-decomposed padded input (one batch image)
    # w_ref : (OC, n_dh*n_dw*gk) grouped conv weights (zero-padded taps), gk=s*s*C
    # o_ref : (OC, OH*OWp)       channel-major output slab (lanes = spatial)
    msp = oh * owp
    acc = None
    for dh in range(n_dh):
        for dw in range(n_dw):
            g = dh * n_dw + dw
            off = dh * owp + dw                        # static, contiguous window
            tap = x_ref[:, off:off + msp]              # (gk, msp)
            wg = w_ref[:, g * gk:(g + 1) * gk]         # (OC, gk)
            part = jnp.dot(wg, tap, preferred_element_type=jnp.float32)
            acc = part if acc is None else acc + part

    if activate_fn is None:
        pass  # nn.Identity()
    elif activate_fn == "relu":
        acc = jnp.maximum(acc, 0.0)
    elif activate_fn == "gelu":
        # exact (erf-based) GELU, matching torch.nn.GELU() default semantics
        acc = 0.5 * acc * (1.0 + jax.lax.erf(acc * (1.0 / math.sqrt(2.0))))
    else:
        raise ValueError(f"unsupported activate_fn: {activate_fn}")

    o_ref[...] = acc.astype(o_ref.dtype)


# ----------------------------------------------------------------------------
# Wrapper: NCHW conv2d(stride, padding) + activation.
# ----------------------------------------------------------------------------
def lgn_ende_multi_forward(x, w, *, stride, padding, activate_fn,
                           mxu_dtype=None,
                           vmem_limit_bytes=48 * 1024 * 1024):
    """x: (B, C, H, W), w: (OC, C, KH, KW)  ->  (B, OC, OH, OW)."""
    B, C, H, W = x.shape
    OC, IC, KH, KW = w.shape
    assert IC == C
    s = int(stride)
    p = int(padding)
    assert s >= 1

    OH = (H + 2 * p - KH) // s + 1
    OW = (W + 2 * p - KW) // s + 1
    assert OH >= 1 and OW >= 1

    # phase-group extents: taps (kh, kw) grouped by (kh // s, kw // s)
    n_dh = (KH - 1) // s + 1
    n_dw = (KW - 1) // s + 1
    OWp = OW + (n_dw - 1)                              # phase columns per row
    HPs = OH + (n_dh - 1) + (1 if n_dw > 1 else 0)     # phase rows (+1 slack for
                                                       #  harmless wrap-around reads)
    Hp2 = s * HPs                                      # padded input height
    Wp2 = s * OWp                                      # padded input width

    # --- glue: zero-pad input to exactly (Hp2, Wp2); crop rows/cols the conv
    #     never reads (can happen when (H+2p-K) % s != 0).
    rows_keep = min(H, Hp2 - p)
    cols_keep = min(W, Wp2 - p)
    xp = jnp.pad(
        x[:, :, :rows_keep, :cols_keep],
        ((0, 0), (0, 0),
         (p, Hp2 - p - rows_keep),
         (p, Wp2 - p - cols_keep)),
    )  # (B, C, Hp2, Wp2)

    # --- phase decomposition (size-preserving relayout, done once in XLA):
    #     x_ph[b, i, j, c, r, q] = xp[b, c, s*r + i, s*q + j]
    x_ph = xp.reshape(B, C, HPs, s, OWp, s)
    x_ph = jnp.transpose(x_ph, (0, 3, 5, 1, 2, 4))     # (B, s, s, C, HPs, OWp)
    SSC = s * s * C
    x_flat = x_ph.reshape(B, SSC, HPs * OWp)

    # --- grouped weight: (OC, n_dh, n_dw, i, j, C), zero for taps beyond (KH,KW)
    w_pad = jnp.pad(w, ((0, 0), (0, 0), (0, n_dh * s - KH), (0, n_dw * s - KW)))
    w_grp = w_pad.reshape(OC, C, n_dh, s, n_dw, s)
    w_grp = jnp.transpose(w_grp, (0, 2, 4, 3, 5, 1))   # (OC, dh, dw, i, j, C)
    w_grp = w_grp.reshape(OC, n_dh * n_dw * SSC)

    if mxu_dtype is not None:
        # bf16 MXU path for compute-bound configs (accumulation stays f32).
        x_flat = x_flat.astype(mxu_dtype)
        w_grp = w_grp.astype(mxu_dtype)

    MSP = OH * OWp

    out = pl.pallas_call(
        functools.partial(
            _lgn_conv_kernel,
            n_dh=n_dh, n_dw=n_dw, gk=SSC, owp=OWp, oh=OH,
            activate_fn=activate_fn,
        ),
        out_shape=jax.ShapeDtypeStruct((B, OC, MSP), x.dtype),
        grid_spec=pltpu.PrefetchScalarGridSpec(
            num_scalar_prefetch=0,
            grid=(B,),
            in_specs=[
                # per-batch phase-decomposed image (whole image = one big tile)
                pl.BlockSpec((None, SSC, HPs * OWp), lambda b: (b, 0, 0)),
                # grid-invariant weight: fetched once by the pipeline
                pl.BlockSpec((OC, n_dh * n_dw * SSC), lambda b: (0, 0)),
            ],
            out_specs=pl.BlockSpec((None, OC, MSP), lambda b: (b, 0, 0)),
        ),
        compiler_params=pltpu.CompilerParams(
            dimension_semantics=("parallel",),   # batches are independent (v7x 2-TC)
            vmem_limit_bytes=vmem_limit_bytes,   # conservative for v7x's 64 MiB VMEM
        ),
    )(x_flat, w_grp)

    # channel-major result is already NCHW-ordered: cheap reshape + column slice.
    out = out.reshape(B, OC, OH, OWp)[:, :, :, :OW]
    return out


# ----------------------------------------------------------------------------
# Reference (plain JAX) for a correctness check.
# ----------------------------------------------------------------------------
def _reference_forward(x, w, *, stride, padding, activate_fn):
    y = jax.lax.conv_general_dilated(
        x, w,
        window_strides=(stride, stride),
        padding=[(padding, padding), (padding, padding)],
        dimension_numbers=("NCHW", "OIHW", "NCHW"),
    )
    if activate_fn == "relu":
        y = jnp.maximum(y, 0.0)
    elif activate_fn == "gelu":
        y = 0.5 * y * (1.0 + jax.lax.erf(y / math.sqrt(2.0)))
    return y


if __name__ == "__main__":
    # --- synthetic "arg" configuration (matches the module's __init__) -----
    batch = 2
    channel = 4            # arg.channel  (input channels)
    n_vector = 2           # arg.n_vector
    vector_length = 4      # arg.vector_length
    out_channels = n_vector * vector_length   # conv.get_weight().size(0)
    lgn_kernel_size = 5    # arg.lgn_kernel_size
    lgn_stride = 2         # arg.lgn_stride
    lgn_padding = (lgn_kernel_size - 1) // 2  # computed exactly as in __init__
    activate_fn = "relu"   # arg.activate_fn in {None, 'gelu', 'relu'}
    H = W = 16

    # --- deterministic parameters / inputs ---------------------------------
    key = jax.random.PRNGKey(0)
    kx, kw = jax.random.split(key)
    x = jax.random.normal(kx, (batch, channel, H, W), dtype=jnp.float32)
    w = 0.1 * jax.random.normal(
        kw, (out_channels, channel, lgn_kernel_size, lgn_kernel_size),
        dtype=jnp.float32,
    )

    # --- run Pallas kernel ---------------------------------------------------
    y = lgn_ende_multi_forward(
        x, w, stride=lgn_stride, padding=lgn_padding, activate_fn=activate_fn
    )
    y = jax.block_until_ready(y)

    # --- check against plain-JAX reference ----------------------------------
    y_ref = _reference_forward(
        x, w, stride=lgn_stride, padding=lgn_padding, activate_fn=activate_fn
    )
    np.testing.assert_allclose(np.asarray(y), np.asarray(y_ref), atol=1e-4, rtol=1e-4)

    print("KERNEL_OK")
</pallas_src>

<mosaic_0001>
module attributes {stable_mosaic.version = 11 : i64} {
  func.func @_lgn_conv_kernel(%arg0: i32, %arg1: memref<1x16x110xf32, #tpu.memory_space<vmem>>, %arg2: memref<8x144xf32, #tpu.memory_space<vmem>>, %arg3: memref<1x8x80xf32, #tpu.memory_space<vmem>>) attributes {dimension_semantics = [#tpu.dimension_semantics<parallel>], iteration_bounds = array<i64: 2>, scalar_prefetch = 0 : i64, scratch_operands = 0 : i64, tpu.core_type = #tpu.core_type<tc>, window_params = [{transform_indices = @transform_0, window_bounds = array<i64: 1, 16, 110>}, {pipeline_mode = #tpu.pipeline_mode<synchronous>, transform_indices = @transform_1, window_bounds = array<i64: 8, 144>}, {transform_indices = @transform_2, window_bounds = array<i64: 1, 8, 80>}]} {
    %c0 = arith.constant 0 : index
    %c0_0 = arith.constant 0 : index
    %c0_1 = arith.constant 0 : index
    %0 = vector.load %arg1[%c0, %c0_0, %c0_1] : memref<1x16x110xf32, #tpu.memory_space<vmem>>, vector<1x16x80xf32>
    %1 = vector.shape_cast %0 : vector<1x16x80xf32> to vector<16x80xf32>
    %c0_2 = arith.constant 0 : index
    %c0_3 = arith.constant 0 : index
    %2 = vector.load %arg2[%c0_2, %c0_3] : memref<8x144xf32, #tpu.memory_space<vmem>>, vector<8x16xf32>
    %cst = arith.constant dense<0.000000e+00> : vector<8x80xf32>
    %3 = tpu.matmul %2, %1, %cst {dimension_numbers = #tpu.dot_dimension_numbers<[1], [0], [0], [1], [0, 0, 1, 1], [], []>} : vector<8x16xf32>, vector<16x80xf32>, vector<8x80xf32> -> vector<8x80xf32>
    %c0_4 = arith.constant 0 : index
    %c0_5 = arith.constant 0 : index
    %c1 = arith.constant 1 : index
    %4 = vector.load %arg1[%c0_4, %c0_5, %c1] : memref<1x16x110xf32, #tpu.memory_space<vmem>>, vector<1x16x80xf32>
    %5 = vector.shape_cast %4 : vector<1x16x80xf32> to vector<16x80xf32>
    %c0_6 = arith.constant 0 : index
    %c16 = arith.constant 16 : index
    %6 = vector.load %arg2[%c0_6, %c16] : memref<8x144xf32, #tpu.memory_space<vmem>>, vector<8x16xf32>
    %cst_7 = arith.constant dense<0.000000e+00> : vector<8x80xf32>
    %7 = tpu.matmul %6, %5, %cst_7 {dimension_numbers = #tpu.dot_dimension_numbers<[1], [0], [0], [1], [0, 0, 1, 1], [], []>} : vector<8x16xf32>, vector<16x80xf32>, vector<8x80xf32> -> vector<8x80xf32>
    %8 = arith.addf %3, %7 : vector<8x80xf32>
    %c0_8 = arith.constant 0 : index
    %c0_9 = arith.constant 0 : index
    %c2 = arith.constant 2 : index
    %9 = vector.load %arg1[%c0_8, %c0_9, %c2] : memref<1x16x110xf32, #tpu.memory_space<vmem>>, vector<1x16x80xf32>
    %10 = vector.shape_cast %9 : vector<1x16x80xf32> to vector<16x80xf32>
    %c0_10 = arith.constant 0 : index
    %c32 = arith.constant 32 : index
    %11 = vector.load %arg2[%c0_10, %c32] : memref<8x144xf32, #tpu.memory_space<vmem>>, vector<8x16xf32>
    %cst_11 = arith.constant dense<0.000000e+00> : vector<8x80xf32>
    %12 = tpu.matmul %11, %10, %cst_11 {dimension_numbers = #tpu.dot_dimension_numbers<[1], [0], [0], [1], [0, 0, 1, 1], [], []>} : vector<8x16xf32>, vector<16x80xf32>, vector<8x80xf32> -> vector<8x80xf32>
    %13 = arith.addf %8, %12 : vector<8x80xf32>
    %c0_12 = arith.constant 0 : index
    %c0_13 = arith.constant 0 : index
    %c10 = arith.constant 10 : index
    %14 = vector.load %arg1[%c0_12, %c0_13, %c10] : memref<1x16x110xf32, #tpu.memory_space<vmem>>, vector<1x16x80xf32>
    %15 = vector.shape_cast %14 : vector<1x16x80xf32> to vector<16x80xf32>
    %c0_14 = arith.constant 0 : index
    %c48 = arith.constant 48 : index
    %16 = vector.load %arg2[%c0_14, %c48] : memref<8x144xf32, #tpu.memory_space<vmem>>, vector<8x16xf32>
    %cst_15 = arith.constant dense<0.000000e+00> : vector<8x80xf32>
    %17 = tpu.matmul %16, %15, %cst_15 {dimension_numbers = #tpu.dot_dimension_numbers<[1], [0], [0], [1], [0, 0, 1, 1], [], []>} : vector<8x16xf32>, vector<16x80xf32>, vector<8x80xf32> -> vector<8x80xf32>
    %18 = arith.addf %13, %17 : vector<8x80xf32>
    %c0_16 = arith.constant 0 : index
    %c0_17 = arith.constant 0 : index
    %c11 = arith.constant 11 : index
    %19 = vector.load %arg1[%c0_16, %c0_17, %c11] : memref<1x16x110xf32, #tpu.memory_space<vmem>>, vector<1x16x80xf32>
    %20 = vector.shape_cast %19 : vector<1x16x80xf32> to vector<16x80xf32>
    %c0_18 = arith.constant 0 : index
    %c64 = arith.constant 64 : index
    %21 = vector.load %arg2[%c0_18, %c64] : memref<8x144xf32, #tpu.memory_space<vmem>>, vector<8x16xf32>
    %cst_19 = arith.constant dense<0.000000e+00> : vector<8x80xf32>
    %22 = tpu.matmul %21, %20, %cst_19 {dimension_numbers = #tpu.dot_dimension_numbers<[1], [0], [0], [1], [0, 0, 1, 1], [], []>} : vector<8x16xf32>, vector<16x80xf32>, vector<8x80xf32> -> vector<8x80xf32>
    %23 = arith.addf %18, %22 : vector<8x80xf32>
    %c0_20 = arith.constant 0 : index
    %c0_21 = arith.constant 0 : index
    %c12 = arith.constant 12 : index
    %24 = vector.load %arg1[%c0_20, %c0_21, %c12] : memref<1x16x110xf32, #tpu.memory_space<vmem>>, vector<1x16x80xf32>
    %25 = vector.shape_cast %24 : vector<1x16x80xf32> to vector<16x80xf32>
    %c0_22 = arith.constant 0 : index
    %c80 = arith.constant 80 : index
    %26 = vector.load %arg2[%c0_22, %c80] : memref<8x144xf32, #tpu.memory_space<vmem>>, vector<8x16xf32>
    %cst_23 = arith.constant dense<0.000000e+00> : vector<8x80xf32>
    %27 = tpu.matmul %26, %25, %cst_23 {dimension_numbers = #tpu.dot_dimension_numbers<[1], [0], [0], [1], [0, 0, 1, 1], [], []>} : vector<8x16xf32>, vector<16x80xf32>, vector<8x80xf32> -> vector<8x80xf32>
    %28 = arith.addf %23, %27 : vector<8x80xf32>
    %c0_24 = arith.constant 0 : index
    %c0_25 = arith.constant 0 : index
    %c20 = arith.constant 20 : index
    %29 = vector.load %arg1[%c0_24, %c0_25, %c20] : memref<1x16x110xf32, #tpu.memory_space<vmem>>, vector<1x16x80xf32>
    %30 = vector.shape_cast %29 : vector<1x16x80xf32> to vector<16x80xf32>
    %c0_26 = arith.constant 0 : index
    %c96 = arith.constant 96 : index
    %31 = vector.load %arg2[%c0_26, %c96] : memref<8x144xf32, #tpu.memory_space<vmem>>, vector<8x16xf32>
    %cst_27 = arith.constant dense<0.000000e+00> : vector<8x80xf32>
    %32 = tpu.matmul %31, %30, %cst_27 {dimension_numbers = #tpu.dot_dimension_numbers<[1], [0], [0], [1], [0, 0, 1, 1], [], []>} : vector<8x16xf32>, vector<16x80xf32>, vector<8x80xf32> -> vector<8x80xf32>
    %33 = arith.addf %28, %32 : vector<8x80xf32>
    %c0_28 = arith.constant 0 : index
    %c0_29 = arith.constant 0 : index
    %c21 = arith.constant 21 : index
    %34 = vector.load %arg1[%c0_28, %c0_29, %c21] : memref<1x16x110xf32, #tpu.memory_space<vmem>>, vector<1x16x80xf32>
    %35 = vector.shape_cast %34 : vector<1x16x80xf32> to vector<16x80xf32>
    %c0_30 = arith.constant 0 : index
    %c112 = arith.constant 112 : index
    %36 = vector.load %arg2[%c0_30, %c112] : memref<8x144xf32, #tpu.memory_space<vmem>>, vector<8x16xf32>
    %cst_31 = arith.constant dense<0.000000e+00> : vector<8x80xf32>
    %37 = tpu.matmul %36, %35, %cst_31 {dimension_numbers = #tpu.dot_dimension_numbers<[1], [0], [0], [1], [0, 0, 1, 1], [], []>} : vector<8x16xf32>, vector<16x80xf32>, vector<8x80xf32> -> vector<8x80xf32>
    %38 = arith.addf %33, %37 : vector<8x80xf32>
    %c0_32 = arith.constant 0 : index
    %c0_33 = arith.constant 0 : index
    %c22 = arith.constant 22 : index
    %39 = vector.load %arg1[%c0_32, %c0_33, %c22] : memref<1x16x110xf32, #tpu.memory_space<vmem>>, vector<1x16x80xf32>
    %40 = vector.shape_cast %39 : vector<1x16x80xf32> to vector<16x80xf32>
    %c0_34 = arith.constant 0 : index
    %c128 = arith.constant 128 : index
    %41 = vector.load %arg2[%c0_34, %c128] : memref<8x144xf32, #tpu.memory_space<vmem>>, vector<8x16xf32>
    %cst_35 = arith.constant dense<0.000000e+00> : vector<8x80xf32>
    %42 = tpu.matmul %41, %40, %cst_35 {dimension_numbers = #tpu.dot_dimension_numbers<[1], [0], [0], [1], [0, 0, 1, 1], [], []>} : vector<8x16xf32>, vector<16x80xf32>, vector<8x80xf32> -> vector<8x80xf32>
    %43 = arith.addf %38, %42 : vector<8x80xf32>
    %cst_36 = arith.constant 0.000000e+00 : f32
    %44 = vector.broadcast %cst_36 : f32 to vector<8x80xf32>
    %45 = arith.maximumf %43, %44 : vector<8x80xf32>
    %c0_37 = arith.constant 0 : index
    %c0_38 = arith.constant 0 : index
    %c0_39 = arith.constant 0 : index
    %46 = vector.load %arg3[%c0_37, %c0_38, %c0_39] : memref<1x8x80xf32, #tpu.memory_space<vmem>>, vector<1x8x80xf32>
    %47 = vector.shape_cast %46 : vector<1x8x80xf32> to vector<8x80xf32>
    %48 = vector.shape_cast %45 : vector<8x80xf32> to vector<1x8x80xf32>
    tpu.vector_store %arg3[%c0_37, %c0_38, %c0_39], %48 {strides = array<i32>} : memref<1x8x80xf32, #tpu.memory_space<vmem>>, vector<1x8x80xf32>,
    return
  }
  func.func @transform_0(%arg0: i32) -> (i32, i32, i32) {
    %c0_i32 = arith.constant 0 : i32
    %c0_i32_0 = arith.constant 0 : i32
    %c0_i32_1 = arith.constant 0 : i32
    return %arg0, %c0_i32, %c0_i32_0 : i32, i32, i32
  }
  func.func @transform_1(%arg0: i32) -> (i32, i32) {
    %c0_i32 = arith.constant 0 : i32
    %c0_i32_0 = arith.constant 0 : i32
    %c0_i32_1 = arith.constant 0 : i32
    return %c0_i32, %c0_i32_0 : i32, i32
  }
  func.func @transform_2(%arg0: i32) -> (i32, i32, i32) {
    %c0_i32 = arith.constant 0 : i32
    %c0_i32_0 = arith.constant 0 : i32
    %c0_i32_1 = arith.constant 0 : i32
    return %arg0, %c0_i32, %c0_i32_0 : i32, i32, i32
  }
}

</mosaic_0001>

<llo_original>
// kernel: tpu_custom_call.1
$region0: #{tpu_custom_call.1}
  #allocation0 [shape = 'u32[]', space=smem, size = 0x4, offset = 0x4, fixed_abs, tag = 'smem constant byte address 0x4 - core index']
  #allocation1 [shape = 'u32[144,128]{1,0:T(1,128)}', space=vmem, size = 0x12000, scoped, tag = 'internal scratch']
  %s0 = inlined_call_operand.hbm [shape: f32[2,16,110], index: 0, kind: input, shape index: {}]
  %s1 = inlined_call_operand.hbm [shape: f32[8,144], index: 1, kind: input, shape index: {}]
  %s2 = inlined_call_operand.hbm [shape: f32[2,8,80], index: 2, kind: output, shape index: {}]
  %s3 = sld [smem:[#allocation0]]
  $region49: #{tpu_custom_call.1} parent=0
    _
  %s5 = ssub.s32 1, %s3
  %s6 = scalar_select 0, %s5, %s3
  $region1: #{tpu_custom_call.1} parent=0
    #allocation2 [shape = 'u8[16384]{0}', space=vmem, size = 0x4000, scoped, tag = 'input window, operand 0']
    #allocation3 [shape = 's32[2]{0}', space=sflag, size = 0x8, scoped, tag = 'scoped memory for tpu_custom_call.1']
    #allocation4 [shape = 's32[2]{0}', space=sflag, size = 0x8, scoped, tag = 'scoped memory for tpu_custom_call.1']
    #allocation5 [shape = 'u8[8192]{0}', space=vmem, size = 0x2000, scoped, tag = 'input window, operand 1, single buffered']
    #allocation6 [shape = 's32[1]{0}', space=sflag, size = 0x4, scoped, tag = 'scoped memory for tpu_custom_call.1']
    #allocation7 [shape = 'u8[8192]{0}', space=vmem, size = 0x2000, scoped, tag = 'output window, operand 0']
    %7 = vsyncpa [#allocation3], 0
    %s8 = scalar_lea.sflag [#allocation3], 1
    %9 = vsyncpa %s8, 0
    %10 = vsyncpa [#allocation6], 0
    %11 = vsyncpa [#allocation4], 0
    %s12 = scalar_lea.sflag [#allocation4], 1
    %13 = vsyncpa %s12, 0
    loop: start=0, step=1, limit=4
    $region2: #{tpu_custom_call.1} parent=1 // loop_pre_header
      _
    $region3: #{tpu_custom_call.1} parent=1 // loop_header
      %s15 = sphi 0, %s19
      %p16 = scmp.ge.s32.totalorder %s15, 4
      %s25 = sphi 0, %s27
      %s28 = sphi 0, %s25
      %s29 = sphi 0, %s28
      %s45 = sphi 0, %s29
      %s49 = sphi 0, %s49
      %s51 = sphi 0, %s49
      %s52 = sphi 0, %s51
      %s66 = sphi 0, %s52
      %s72 = sphi 0, %s74
      %s75 = sphi 0, %s72
      %s76 = sphi 0, %s75
      %s92 = sphi 0, %s76
    $region4: #{tpu_custom_call.1} parent=1 // loop_header_branch
      %18 = sbr.rel (%p16) target = $region8
    $region5: #{tpu_custom_call.1} parent=1 // loop_body
      %s20 = ssub.s32 %s15, 1
      %s21 = ssub.s32 %s15, 2
      %s22 = sadd.s32 %s15, 1
      %s23 = ssub.s32 %s15, %s22
      %p24 = scmp.eq.s32.totalorder %s23, 0
      %s26 = sadd.s32 %s25, 1
      %s27 = scalar_select %p24, %s25, %s26
      %p30 = pneg %p24
      %p31 = scmp.eq.s32.totalorder %s15, 1
      %p32 = por %p30, %p31
      %p33 = scmp.ne.s32.totalorder %s25, %s28
      %p34 = scmp.eq.s32.totalorder %s15, 0
      %p35 = por %p33, %p34
      %p36 = scmp.ne.s32.totalorder %s25, %s28
      %p37 = scmp.eq.s32.totalorder %s20, 1
      %p38 = por %p36, %p37
      %p39 = scmp.ne.s32.totalorder %s28, %s29
      %p40 = scmp.eq.s32.totalorder %s20, 0
      %p41 = por %p39, %p40
      %p42 = scmp.ne.s32.totalorder %s28, %s29
      %p43 = scmp.eq.s32.totalorder %s21, 1
      %p44 = por %p42, %p43
      %p46 = scmp.ne.s32.totalorder %s29, %s45
      %p47 = scmp.eq.s32.totalorder %s21, 0
      %p48 = por %p46, %p47
      %s50 = sadd.s32 %s49, 1
      %p53 = scmp.eq.s32.totalorder %s15, 1
      %p54 = scmp.ne.s32.totalorder %s49, %s51
      %p55 = scmp.eq.s32.totalorder %s15, 0
      %p56 = por %p54, %p55
      %p57 = scmp.ne.s32.totalorder %s49, %s51
      %p58 = scmp.eq.s32.totalorder %s20, 1
      %p59 = por %p57, %p58
      %p60 = scmp.ne.s32.totalorder %s51, %s52
      %p61 = scmp.eq.s32.totalorder %s20, 0
      %p62 = por %p60, %p61
      %p63 = scmp.ne.s32.totalorder %s51, %s52
      %p64 = scmp.eq.s32.totalorder %s21, 1
      %p65 = por %p63, %p64
      %p67 = scmp.ne.s32.totalorder %s52, %s66
      %p68 = scmp.eq.s32.totalorder %s21, 0
      %p69 = por %p67, %p68
      %s70 = ssub.s32 %s15, %s22
      %p71 = scmp.eq.s32.totalorder %s70, 0
      %s73 = sadd.s32 %s72, 1
      %s74 = scalar_select %p71, %s72, %s73
      %p77 = pneg %p71
      %p78 = scmp.eq.s32.totalorder %s15, 1
      %p79 = por %p77, %p78
      %p80 = scmp.ne.s32.totalorder %s72, %s75
      %p81 = scmp.eq.s32.totalorder %s15, 0
      %p82 = por %p80, %p81
      %p83 = scmp.ne.s32.totalorder %s72, %s75
      %p84 = scmp.eq.s32.totalorder %s20, 1
      %p85 = por %p83, %p84
      %p86 = scmp.ne.s32.totalorder %s75, %s76
      %p87 = scmp.eq.s32.totalorder %s20, 0
      %p88 = por %p86, %p87
      %p89 = scmp.ne.s32.totalorder %s75, %s76
      %p90 = scmp.eq.s32.totalorder %s21, 1
      %p91 = por %p89, %p90
      %p93 = scmp.ne.s32.totalorder %s76, %s92
      %p94 = scmp.eq.s32.totalorder %s21, 0
      %p95 = por %p93, %p94
      %p96 = scmp.le.s32.totalorder 1, %s15
      %p97 = scmp.lt.s32.totalorder %s15, 3
      %p98 = pnand %p96, %p97
      %p99 = pneg %p98
      // Predicated region
      $region9: #{tpu_custom_call.1} parent=5 // pred_check
        _
      $region10: #{tpu_custom_call.1} parent=5 // pred_check_branch
        %101 = sbr.rel (%p98) target = $region12
      $region11: #{tpu_custom_call.1} parent=5 // pred_region
        %s102 = ssub.s32 %s15, 1
        // Predicated region
        $region13: #{tpu_custom_call.1} parent=11 // pred_check
          %p103 = pneg %p62
        $region14: #{tpu_custom_call.1} parent=11 // pred_check_branch
          %105 = sbr.rel (%p103) target = $region16
        $region15: #{tpu_custom_call.1} parent=11 // pred_region
          %s107 = ssub.s32 256, 256
          %108 = vsyncadd [#allocation6], %s107
          %s110 = sshll.u32 [#allocation5], 4
          %s111 = int_to_ptr.vmem [resolvable:$true] %s110
          %113 = dma.hbm_to_vmem [thread:$0]  %s1, 256, %s111, [#allocation6]
        $region16: #{tpu_custom_call.1} parent=11 // pred_fallthru
          _
      $region12: #{tpu_custom_call.1} parent=5 // pred_fallthru
        _
      %p114 = scmp.lt.s32.totalorder %s15, 2
      // Predicated region
      $region17: #{tpu_custom_call.1} parent=5 // pred_check
        %p115 = pneg %p114
      $region18: #{tpu_custom_call.1} parent=5 // pred_check_branch
        %117 = sbr.rel (%p115) target = $region20
      $region19: #{tpu_custom_call.1} parent=5 // pred_region
        // Predicated region
        $region21: #{tpu_custom_call.1} parent=19 // pred_check
          %p118 = pneg %p35
        $region22: #{tpu_custom_call.1} parent=19 // pred_check_branch
          %120 = sbr.rel (%p118) target = $region24
        $region23: #{tpu_custom_call.1} parent=19 // pred_region
          %s121 = sand.u32 %s25, 1
          %s122 = scalar_lea.sflag [#allocation3], %s121
          %s123 = sand.u32 %s25, 1
          %s124 = smul.addr %s123, 16
          %s125 = scalar_lea.vmem [#allocation2], %s124
          %s127 = ssub.s32 256, 256
          %128 = vsyncadd %s122, %s127
          %s129 = smul.addr %s15, 2
          %s130 = smul.addr %s129, 128
          %s131 = scalar_lea.hbm %s0, %s130
          %s132 = sshll.u32 %s125, 4
          %s133 = int_to_ptr.vmem [resolvable:$true] %s132
          %138 = dma.hbm_to_vmem [thread:$0]  %s131, 256, %s133, %s122, 128, 128, 8
        $region24: #{tpu_custom_call.1} parent=19 // pred_fallthru
          _
      $region20: #{tpu_custom_call.1} parent=5 // pred_fallthru
        _
      %p139 = scmp.le.s32.totalorder 1, %s15
      %p140 = scmp.lt.s32.totalorder %s15, 3
      %p141 = pnand %p139, %p140
      %p142 = pneg %p141
      // Predicated region
      $region25: #{tpu_custom_call.1} parent=5 // pred_check
        _
      $region26: #{tpu_custom_call.1} parent=5 // pred_check_branch
        %144 = sbr.rel (%p141) target = $region28
      $region27: #{tpu_custom_call.1} parent=5 // pred_region
        %s145 = ssub.s32 %s15, 1
        %s146 = sand.u32 %s28, 1
        %s147 = scalar_lea.sflag [#allocation3], %s146
        %s148 = sand.u32 %s28, 1
        %s149 = smul.addr %s148, 16
        %s150 = scalar_lea.vmem [#allocation2], %s149
        // Predicated region
        $region29: #{tpu_custom_call.1} parent=27 // pred_check
          %p151 = pneg %p41
        $region30: #{tpu_custom_call.1} parent=27 // pred_check_branch
          %153 = sbr.rel (%p151) target = $region32
        $region31: #{tpu_custom_call.1} parent=27 // pred_region
          %154 = dma.done %s147, 256
        $region32: #{tpu_custom_call.1} parent=27 // pred_fallthru
          _
        // Predicated region
        $region33: #{tpu_custom_call.1} parent=27 // pred_check
          %p155 = pneg %p62
        $region34: #{tpu_custom_call.1} parent=27 // pred_check_branch
          %157 = sbr.rel (%p155) target = $region36
        $region35: #{tpu_custom_call.1} parent=27 // pred_region
          %158 = dma.done [#allocation6], 256
        $region36: #{tpu_custom_call.1} parent=27 // pred_fallthru
          _
        %s159 = sand.u32 %s28, 1
        %s160 = scalar_lea.sflag [#allocation3], %s159
        %s161 = sand.u32 %s28, 1
        %s162 = smul.addr %s161, 16
        %s163 = scalar_lea.vmem [#allocation2], %s162
        %p164 = pneg %p41
        %p165 = pneg %p38
        %p166 = pneg %p62
        %p167 = pneg %p59
        %p168 = pneg %p88
        %p169 = pneg %p85
        %s170 = sand.u32 %s75, 1
        %s171 = scalar_lea.sflag [#allocation4], %s170
        %s172 = sand.u32 %s75, 1
        %s173 = smul.addr %s172, 8
        %s174 = scalar_lea.vmem [#allocation7], %s173
        %v175 = vld [vmem:[%s150] sm:$0xff]
        %v176 = vld [vmem:[%s150 + $0x8] sm:$0xff]
        %v177 = vld [vmem:[#allocation5] sm:$0xff]
        %179 = vrot.lane.b32.xlu0 %v177, 112
        %v180 = vpop.permute.xlu0 %179
        %183 = vrot.lane.b32.xlu0 %v175, 127
        %v184 = vpop.permute.xlu0 %183
        %185 = vrot.lane.b32.xlu0 %v176, 127
        %v186 = vpop.permute.xlu0 %185
        %vm189 = vcmask 130048
        %v190 = vsel %vm189, %v180, 0
        %192 = vmatprep.subr.mxu0 0.0
        %193 = vmatpush1.msra.mxu0 0.0
        %194 = vmatprep.subr.mxu0 0.0
        %195 = vmatpush1.msra.mxu0 0.0
        %196 = vmatprep.subr.mxu0 0.0
        %197 = vmatpush1.msra.mxu0 0.0
        %198 = vmatprep.subr.mxu0 0.0
        %199 = vmatpush1.msra.mxu0 0.0
        %200 = vmatprep.subr.mxu0 0.0
        %201 = vmatpush1.msra.mxu0 0.0
        %202 = vmatprep.subr.mxu0 0.0
        %203 = vmatpush1.msra.mxu0 0.0
        %204 = vmatprep.subr.mxu0 0.0
        %205 = vmatpush1.msra.mxu0 0.0
        %206 = vmatprep.subr.mxu0 0.0
        %207 = vmatpush1.msra.mxu0 0.0
        %208 = vmatprep.subr.mxu0 0.0
        %209 = vmatpush1.msra.mxu0 0.0
        %210 = vmatprep.subr.mxu0 0.0
        %211 = vmatpush1.msra.mxu0 0.0
        %212 = vmatprep.subr.mxu0 0.0
        %213 = vmatpush1.msra.mxu0 0.0
        %214 = vmatprep.subr.mxu0 0.0
        %215 = vmatpush1.msra.mxu0 0.0
        %216 = vmatprep.subr.mxu0 0.0
        %217 = vmatpush1.msra.mxu0 0.0
        %218 = vmatprep.subr.mxu0 0.0
        %219 = vmatpush1.msra.mxu0 0.0
        %220 = vmatprep.subr.mxu0 0.0
        %221 = vmatpush1.msra.mxu0 %v186
        %222 = vmatprep.subr.mxu0 0.0
        %223 = vmatpush1.msra.mxu0 %v184
        %224 = vmatprep.subr.mxu0 0.0
        %225 = vmatpush2.msra.mxu0 0.0
        %226 = vmatprep.subr.mxu0 0.0
        %227 = vmatpush2.msra.mxu0 0.0
        %228 = vmatprep.subr.mxu0 0.0
        %229 = vmatpush2.msra.mxu0 0.0
        %230 = vmatprep.subr.mxu0 0.0
        %231 = vmatpush2.msra.mxu0 0.0
        %232 = vmatprep.subr.mxu0 0.0
        %233 = vmatpush2.msra.mxu0 0.0
        %234 = vmatprep.subr.mxu0 0.0
        %235 = vmatpush2.msra.mxu0 0.0
        %236 = vmatprep.subr.mxu0 0.0
        %237 = vmatpush2.msra.mxu0 0.0
        %238 = vmatprep.subr.mxu0 0.0
        %239 = vmatpush2.msra.mxu0 0.0
        %240 = vmatprep.subr.mxu0 0.0
        %241 = vmatpush2.msra.mxu0 0.0
        %242 = vmatprep.subr.mxu0 0.0
        %243 = vmatpush2.msra.mxu0 0.0
        %244 = vmatprep.subr.mxu0 0.0
        %245 = vmatpush2.msra.mxu0 0.0
        %246 = vmatprep.subr.mxu0 0.0
        %247 = vmatpush2.msra.mxu0 0.0
        %248 = vmatprep.subr.mxu0 0.0
        %249 = vmatpush2.msra.mxu0 0.0
        %250 = vmatprep.subr.mxu0 0.0
        %251 = vmatpush2.msra.mxu0 0.0
        %252 = vmatprep.subr.mxu0 0.0
        %253 = vmatpush2.msra.mxu0 0.0
        %254 = vmatprep.subr.mxu0 0.0
        %255 = vmatpush2.msra.mxu0 0.0
        %256 = vmatprep.mubr.f32.mxu0 0.0
        %257 = vmatmul.mubr.f32.gmra.mxu0 %v190
        %v258 = vpop.f32.mrf.mxu0
        %v259 = vadd.f32 0.0, %v258
        %v260 = vpop.f32.mrf.mxu0
        %261 = vdwg.mxu0
        %v262 = vsel %vm189, %v177, 0
        %264 = vmatprep.subr.mxu0 0.0
        %265 = vmatpush1.msra.mxu0 0.0
        %266 = vmatprep.subr.mxu0 0.0
        %267 = vmatpush1.msra.mxu0 0.0
        %268 = vmatprep.subr.mxu0 0.0
        %269 = vmatpush1.msra.mxu0 0.0
        %270 = vmatprep.subr.mxu0 0.0
        %271 = vmatpush1.msra.mxu0 0.0
        %272 = vmatprep.subr.mxu0 0.0
        %273 = vmatpush1.msra.mxu0 0.0
        %274 = vmatprep.subr.mxu0 0.0
        %275 = vmatpush1.msra.mxu0 0.0
        %276 = vmatprep.subr.mxu0 0.0
        %277 = vmatpush1.msra.mxu0 0.0
        %278 = vmatprep.subr.mxu0 0.0
        %279 = vmatpush1.msra.mxu0 0.0
        %280 = vmatprep.subr.mxu0 0.0
        %281 = vmatpush1.msra.mxu0 0.0
        %282 = vmatprep.subr.mxu0 0.0
        %283 = vmatpush1.msra.mxu0 0.0
        %284 = vmatprep.subr.mxu0 0.0
        %285 = vmatpush1.msra.mxu0 0.0
        %286 = vmatprep.subr.mxu0 0.0
        %287 = vmatpush1.msra.mxu0 0.0
        %288 = vmatprep.subr.mxu0 0.0
        %289 = vmatpush1.msra.mxu0 0.0
        %290 = vmatprep.subr.mxu0 0.0
        %291 = vmatpush1.msra.mxu0 0.0
        %292 = vmatprep.subr.mxu0 0.0
        %293 = vmatpush1.msra.mxu0 %v176
        %294 = vmatprep.subr.mxu0 0.0
        %295 = vmatpush1.msra.mxu0 %v175
        %296 = vmatprep.subr.mxu0 0.0
        %297 = vmatpush2.msra.mxu0 0.0
        %298 = vmatprep.subr.mxu0 0.0
        %299 = vmatpush2.msra.mxu0 0.0
        %300 = vmatprep.subr.mxu0 0.0
        %301 = vmatpush2.msra.mxu0 0.0
        %302 = vmatprep.subr.mxu0 0.0
        %303 = vmatpush2.msra.mxu0 0.0
        %304 = vmatprep.subr.mxu0 0.0
        %305 = vmatpush2.msra.mxu0 0.0
        %306 = vmatprep.subr.mxu0 0.0
        %307 = vmatpush2.msra.mxu0 0.0
        %308 = vmatprep.subr.mxu0 0.0
        %309 = vmatpush2.msra.mxu0 0.0
        %310 = vmatprep.subr.mxu0 0.0
        %311 = vmatpush2.msra.mxu0 0.0
        %312 = vmatprep.subr.mxu0 0.0
        %313 = vmatpush2.msra.mxu0 0.0
        %314 = vmatprep.subr.mxu0 0.0
        %315 = vmatpush2.msra.mxu0 0.0
        %316 = vmatprep.subr.mxu0 0.0
        %317 = vmatpush2.msra.mxu0 0.0
        %318 = vmatprep.subr.mxu0 0.0
        %319 = vmatpush2.msra.mxu0 0.0
        %320 = vmatprep.subr.mxu0 0.0
        %321 = vmatpush2.msra.mxu0 0.0
        %322 = vmatprep.subr.mxu0 0.0
        %323 = vmatpush2.msra.mxu0 0.0
        %324 = vmatprep.subr.mxu0 0.0
        %325 = vmatpush2.msra.mxu0 0.0
        %326 = vmatprep.subr.mxu0 0.0
        %327 = vmatpush2.msra.mxu0 0.0
        %328 = vmatprep.mubr.f32.mxu0 0.0
        %329 = vmatmul.mubr.f32.gmra.mxu0 %v262
        %v330 = vpop.f32.mrf.mxu0
        %v331 = vadd.f32 %v259, %v330
        %v332 = vpop.f32.mrf.mxu0
        %333 = vdwg.mxu0
        %334 = vrot.lane.b32.xlu0 %v177, 96
        %v335 = vpop.permute.xlu0 %334
        %336 = vrot.lane.b32.xlu0 %v175, 126
        %v337 = vpop.permute.xlu0 %336
        %338 = vrot.lane.b32.xlu0 %v176, 126
        %v339 = vpop.permute.xlu0 %338
        %v342 = vsel %vm189, %v335, 0
        %344 = vmatprep.subr.mxu0 0.0
        %345 = vmatpush1.msra.mxu0 0.0
        %346 = vmatprep.subr.mxu0 0.0
        %347 = vmatpush1.msra.mxu0 0.0
        %348 = vmatprep.subr.mxu0 0.0
        %349 = vmatpush1.msra.mxu0 0.0
        %350 = vmatprep.subr.mxu0 0.0
        %351 = vmatpush1.msra.mxu0 0.0
        %352 = vmatprep.subr.mxu0 0.0
        %353 = vmatpush1.msra.mxu0 0.0
        %354 = vmatprep.subr.mxu0 0.0
        %355 = vmatpush1.msra.mxu0 0.0
        %356 = vmatprep.subr.mxu0 0.0
        %357 = vmatpush1.msra.mxu0 0.0
        %358 = vmatprep.subr.mxu0 0.0
        %359 = vmatpush1.msra.mxu0 0.0
        %360 = vmatprep.subr.mxu0 0.0
        %361 = vmatpush1.msra.mxu0 0.0
        %362 = vmatprep.subr.mxu0 0.0
        %363 = vmatpush1.msra.mxu0 0.0
        %364 = vmatprep.subr.mxu0 0.0
        %365 = vmatpush1.msra.mxu0 0.0
        %366 = vmatprep.subr.mxu0 0.0
        %367 = vmatpush1.msra.mxu0 0.0
        %368 = vmatprep.subr.mxu0 0.0
        %369 = vmatpush1.msra.mxu0 0.0
        %370 = vmatprep.subr.mxu0 0.0
        %371 = vmatpush1.msra.mxu0 0.0
        %372 = vmatprep.subr.mxu0 0.0
        %373 = vmatpush1.msra.mxu0 %v339
        %374 = vmatprep.subr.mxu0 0.0
        %375 = vmatpush1.msra.mxu0 %v337
        %376 = vmatprep.subr.mxu0 0.0
        %377 = vmatpush2.msra.mxu0 0.0
        %378 = vmatprep.subr.mxu0 0.0
        %379 = vmatpush2.msra.mxu0 0.0
        %380 = vmatprep.subr.mxu0 0.0
        %381 = vmatpush2.msra.mxu0 0.0
        %382 = vmatprep.subr.mxu0 0.0
        %383 = vmatpush2.msra.mxu0 0.0
        %384 = vmatprep.subr.mxu0 0.0
        %385 = vmatpush2.msra.mxu0 0.0
        %386 = vmatprep.subr.mxu0 0.0
        %387 = vmatpush2.msra.mxu0 0.0
        %388 = vmatprep.subr.mxu0 0.0
        %389 = vmatpush2.msra.mxu0 0.0
        %390 = vmatprep.subr.mxu0 0.0
        %391 = vmatpush2.msra.mxu0 0.0
        %392 = vmatprep.subr.mxu0 0.0
        %393 = vmatpush2.msra.mxu0 0.0
        %394 = vmatprep.subr.mxu0 0.0
        %395 = vmatpush2.msra.mxu0 0.0
        %396 = vmatprep.subr.mxu0 0.0
        %397 = vmatpush2.msra.mxu0 0.0
        %398 = vmatprep.subr.mxu0 0.0
        %399 = vmatpush2.msra.mxu0 0.0
        %400 = vmatprep.subr.mxu0 0.0
        %401 = vmatpush2.msra.mxu0 0.0
        %402 = vmatprep.subr.mxu0 0.0
        %403 = vmatpush2.msra.mxu0 0.0
        %404 = vmatprep.subr.mxu0 0.0
        %405 = vmatpush2.msra.mxu0 0.0
        %406 = vmatprep.subr.mxu0 0.0
        %407 = vmatpush2.msra.mxu0 0.0
        %408 = vmatprep.mubr.f32.mxu0 0.0
        %409 = vmatmul.mubr.f32.gmra.mxu0 %v342
        %v410 = vpop.f32.mrf.mxu0
        %v411 = vadd.f32 0.0, %v410
        %v412 = vpop.f32.mrf.mxu0
        %413 = vdwg.mxu0
        %v414 = vadd.f32 %v331, %v411
        %415 = vrot.lane.b32.xlu0 %v177, 80
        %v416 = vpop.permute.xlu0 %415
        %417 = vrot.lane.b32.xlu0 %v175, 118
        %v418 = vpop.permute.xlu0 %417
        %419 = vrot.lane.b32.xlu0 %v176, 118
        %v420 = vpop.permute.xlu0 %419
        %v423 = vsel %vm189, %v416, 0
        %425 = vmatprep.subr.mxu0 0.0
        %426 = vmatpush1.msra.mxu0 0.0
        %427 = vmatprep.subr.mxu0 0.0
        %428 = vmatpush1.msra.mxu0 0.0
        %429 = vmatprep.subr.mxu0 0.0
        %430 = vmatpush1.msra.mxu0 0.0
        %431 = vmatprep.subr.mxu0 0.0
        %432 = vmatpush1.msra.mxu0 0.0
        %433 = vmatprep.subr.mxu0 0.0
        %434 = vmatpush1.msra.mxu0 0.0
        %435 = vmatprep.subr.mxu0 0.0
        %436 = vmatpush1.msra.mxu0 0.0
        %437 = vmatprep.subr.mxu0 0.0
        %438 = vmatpush1.msra.mxu0 0.0
        %439 = vmatprep.subr.mxu0 0.0
        %440 = vmatpush1.msra.mxu0 0.0
        %441 = vmatprep.subr.mxu0 0.0
        %442 = vmatpush1.msra.mxu0 0.0
        %443 = vmatprep.subr.mxu0 0.0
        %444 = vmatpush1.msra.mxu0 0.0
        %445 = vmatprep.subr.mxu0 0.0
        %446 = vmatpush1.msra.mxu0 0.0
        %447 = vmatprep.subr.mxu0 0.0
        %448 = vmatpush1.msra.mxu0 0.0
        %449 = vmatprep.subr.mxu0 0.0
        %450 = vmatpush1.msra.mxu0 0.0
        %451 = vmatprep.subr.mxu0 0.0
        %452 = vmatpush1.msra.mxu0 0.0
        %453 = vmatprep.subr.mxu0 0.0
        %454 = vmatpush1.msra.mxu0 %v420
        %455 = vmatprep.subr.mxu0 0.0
        %456 = vmatpush1.msra.mxu0 %v418
        %457 = vmatprep.subr.mxu0 0.0
        %458 = vmatpush2.msra.mxu0 0.0
        %459 = vmatprep.subr.mxu0 0.0
        %460 = vmatpush2.msra.mxu0 0.0
        %461 = vmatprep.subr.mxu0 0.0
        %462 = vmatpush2.msra.mxu0 0.0
        %463 = vmatprep.subr.mxu0 0.0
        %464 = vmatpush2.msra.mxu0 0.0
        %465 = vmatprep.subr.mxu0 0.0
        %466 = vmatpush2.msra.mxu0 0.0
        %467 = vmatprep.subr.mxu0 0.0
        %468 = vmatpush2.msra.mxu0 0.0
        %469 = vmatprep.subr.mxu0 0.0
        %470 = vmatpush2.msra.mxu0 0.0
        %471 = vmatprep.subr.mxu0 0.0
        %472 = vmatpush2.msra.mxu0 0.0
        %473 = vmatprep.subr.mxu0 0.0
        %474 = vmatpush2.msra.mxu0 0.0
        %475 = vmatprep.subr.mxu0 0.0
        %476 = vmatpush2.msra.mxu0 0.0
        %477 = vmatprep.subr.mxu0 0.0
        %478 = vmatpush2.msra.mxu0 0.0
        %479 = vmatprep.subr.mxu0 0.0
        %480 = vmatpush2.msra.mxu0 0.0
        %481 = vmatprep.subr.mxu0 0.0
        %482 = vmatpush2.msra.mxu0 0.0
        %483 = vmatprep.subr.mxu0 0.0
        %484 = vmatpush2.msra.mxu0 0.0
        %485 = vmatprep.subr.mxu0 0.0
        %486 = vmatpush2.msra.mxu0 0.0
        %487 = vmatprep.subr.mxu0 0.0
        %488 = vmatpush2.msra.mxu0 0.0
        %489 = vmatprep.mubr.f32.mxu0 0.0
        %490 = vmatmul.mubr.f32.gmra.mxu0 %v423
        %v491 = vpop.f32.mrf.mxu0
        %v492 = vadd.f32 0.0, %v491
        %v493 = vpop.f32.mrf.mxu0
        %494 = vdwg.mxu0
        %v495 = vadd.f32 %v414, %v492
        %496 = vrot.lane.b32.xlu0 %v177, 64
        %v497 = vpop.permute.xlu0 %496
        %498 = vrot.lane.b32.xlu0 %v175, 117
        %v499 = vpop.permute.xlu0 %498
        %500 = vrot.lane.b32.xlu0 %v176, 117
        %v501 = vpop.permute.xlu0 %500
        %v504 = vsel %vm189, %v497, 0
        %506 = vmatprep.subr.mxu0 0.0
        %507 = vmatpush1.msra.mxu0 0.0
        %508 = vmatprep.subr.mxu0 0.0
        %509 = vmatpush1.msra.mxu0 0.0
        %510 = vmatprep.subr.mxu0 0.0
        %511 = vmatpush1.msra.mxu0 0.0
        %512 = vmatprep.subr.mxu0 0.0
        %513 = vmatpush1.msra.mxu0 0.0
        %514 = vmatprep.subr.mxu0 0.0
        %515 = vmatpush1.msra.mxu0 0.0
        %516 = vmatprep.subr.mxu0 0.0
        %517 = vmatpush1.msra.mxu0 0.0
        %518 = vmatprep.subr.mxu0 0.0
        %519 = vmatpush1.msra.mxu0 0.0
        %520 = vmatprep.subr.mxu0 0.0
        %521 = vmatpush1.msra.mxu0 0.0
        %522 = vmatprep.subr.mxu0 0.0
        %523 = vmatpush1.msra.mxu0 0.0
        %524 = vmatprep.subr.mxu0 0.0
        %525 = vmatpush1.msra.mxu0 0.0
        %526 = vmatprep.subr.mxu0 0.0
        %527 = vmatpush1.msra.mxu0 0.0
        %528 = vmatprep.subr.mxu0 0.0
        %529 = vmatpush1.msra.mxu0 0.0
        %530 = vmatprep.subr.mxu0 0.0
        %531 = vmatpush1.msra.mxu0 0.0
        %532 = vmatprep.subr.mxu0 0.0
        %533 = vmatpush1.msra.mxu0 0.0
        %534 = vmatprep.subr.mxu0 0.0
        %535 = vmatpush1.msra.mxu0 %v501
        %536 = vmatprep.subr.mxu0 0.0
        %537 = vmatpush1.msra.mxu0 %v499
        %538 = vmatprep.subr.mxu0 0.0
        %539 = vmatpush2.msra.mxu0 0.0
        %540 = vmatprep.subr.mxu0 0.0
        %541 = vmatpush2.msra.mxu0 0.0
        %542 = vmatprep.subr.mxu0 0.0
        %543 = vmatpush2.msra.mxu0 0.0
        %544 = vmatprep.subr.mxu0 0.0
        %545 = vmatpush2.msra.mxu0 0.0
        %546 = vmatprep.subr.mxu0 0.0
        %547 = vmatpush2.msra.mxu0 0.0
        %548 = vmatprep.subr.mxu0 0.0
        %549 = vmatpush2.msra.mxu0 0.0
        %550 = vmatprep.subr.mxu0 0.0
        %551 = vmatpush2.msra.mxu0 0.0
        %552 = vmatprep.subr.mxu0 0.0
        %553 = vmatpush2.msra.mxu0 0.0
        %554 = vmatprep.subr.mxu0 0.0
        %555 = vmatpush2.msra.mxu0 0.0
        %556 = vmatprep.subr.mxu0 0.0
        %557 = vmatpush2.msra.mxu0 0.0
        %558 = vmatprep.subr.mxu0 0.0
        %559 = vmatpush2.msra.mxu0 0.0
        %560 = vmatprep.subr.mxu0 0.0
        %561 = vmatpush2.msra.mxu0 0.0
        %562 = vmatprep.subr.mxu0 0.0
        %563 = vmatpush2.msra.mxu0 0.0
        %564 = vmatprep.subr.mxu0 0.0
        %565 = vmatpush2.msra.mxu0 0.0
        %566 = vmatprep.subr.mxu0 0.0
        %567 = vmatpush2.msra.mxu0 0.0
        %568 = vmatprep.subr.mxu0 0.0
        %569 = vmatpush2.msra.mxu0 0.0
        %570 = vmatprep.mubr.f32.mxu0 0.0
        %571 = vmatmul.mubr.f32.gmra.mxu0 %v504
        %v572 = vpop.f32.mrf.mxu0
        %v573 = vadd.f32 0.0, %v572
        %v574 = vpop.f32.mrf.mxu0
        %575 = vdwg.mxu0
        %v576 = vadd.f32 %v495, %v573
        %577 = vrot.lane.b32.xlu0 %v177, 48
        %v578 = vpop.permute.xlu0 %577
        %579 = vrot.lane.b32.xlu0 %v175, 116
        %v580 = vpop.permute.xlu0 %579
        %581 = vrot.lane.b32.xlu0 %v176, 116
        %v582 = vpop.permute.xlu0 %581
        %v585 = vsel %vm189, %v578, 0
        %587 = vmatprep.subr.mxu0 0.0
        %588 = vmatpush1.msra.mxu0 0.0
        %589 = vmatprep.subr.mxu0 0.0
        %590 = vmatpush1.msra.mxu0 0.0
        %591 = vmatprep.subr.mxu0 0.0
        %592 = vmatpush1.msra.mxu0 0.0
        %593 = vmatprep.subr.mxu0 0.0
        %594 = vmatpush1.msra.mxu0 0.0
        %595 = vmatprep.subr.mxu0 0.0
        %596 = vmatpush1.msra.mxu0 0.0
        %597 = vmatprep.subr.mxu0 0.0
        %598 = vmatpush1.msra.mxu0 0.0
        %599 = vmatprep.subr.mxu0 0.0
        %600 = vmatpush1.msra.mxu0 0.0
        %601 = vmatprep.subr.mxu0 0.0
        %602 = vmatpush1.msra.mxu0 0.0
        %603 = vmatprep.subr.mxu0 0.0
        %604 = vmatpush1.msra.mxu0 0.0
        %605 = vmatprep.subr.mxu0 0.0
        %606 = vmatpush1.msra.mxu0 0.0
        %607 = vmatprep.subr.mxu0 0.0
        %608 = vmatpush1.msra.mxu0 0.0
        %609 = vmatprep.subr.mxu0 0.0
        %610 = vmatpush1.msra.mxu0 0.0
        %611 = vmatprep.subr.mxu0 0.0
        %612 = vmatpush1.msra.mxu0 0.0
        %613 = vmatprep.subr.mxu0 0.0
        %614 = vmatpush1.msra.mxu0 0.0
        %615 = vmatprep.subr.mxu0 0.0
        %616 = vmatpush1.msra.mxu0 %v582
        %617 = vmatprep.subr.mxu0 0.0
        %618 = vmatpush1.msra.mxu0 %v580
        %619 = vmatprep.subr.mxu0 0.0
        %620 = vmatpush2.msra.mxu0 0.0
        %621 = vmatprep.subr.mxu0 0.0
        %622 = vmatpush2.msra.mxu0 0.0
        %623 = vmatprep.subr.mxu0 0.0
        %624 = vmatpush2.msra.mxu0 0.0
        %625 = vmatprep.subr.mxu0 0.0
        %626 = vmatpush2.msra.mxu0 0.0
        %627 = vmatprep.subr.mxu0 0.0
        %628 = vmatpush2.msra.mxu0 0.0
        %629 = vmatprep.subr.mxu0 0.0
        %630 = vmatpush2.msra.mxu0 0.0
        %631 = vmatprep.subr.mxu0 0.0
        %632 = vmatpush2.msra.mxu0 0.0
        %633 = vmatprep.subr.mxu0 0.0
        %634 = vmatpush2.msra.mxu0 0.0
        %635 = vmatprep.subr.mxu0 0.0
        %636 = vmatpush2.msra.mxu0 0.0
        %637 = vmatprep.subr.mxu0 0.0
        %638 = vmatpush2.msra.mxu0 0.0
        %639 = vmatprep.subr.mxu0 0.0
        %640 = vmatpush2.msra.mxu0 0.0
        %641 = vmatprep.subr.mxu0 0.0
        %642 = vmatpush2.msra.mxu0 0.0
        %643 = vmatprep.subr.mxu0 0.0
        %644 = vmatpush2.msra.mxu0 0.0
        %645 = vmatprep.subr.mxu0 0.0
        %646 = vmatpush2.msra.mxu0 0.0
        %647 = vmatprep.subr.mxu0 0.0
        %648 = vmatpush2.msra.mxu0 0.0
        %649 = vmatprep.subr.mxu0 0.0
        %650 = vmatpush2.msra.mxu0 0.0
        %651 = vmatprep.mubr.f32.mxu0 0.0
        %652 = vmatmul.mubr.f32.gmra.mxu0 %v585
        %v653 = vpop.f32.mrf.mxu0
        %v654 = vadd.f32 0.0, %v653
        %v655 = vpop.f32.mrf.mxu0
        %656 = vdwg.mxu0
        %v657 = vadd.f32 %v576, %v654
        %658 = vrot.lane.b32.xlu0 %v177, 32
        %v659 = vpop.permute.xlu0 %658
        %660 = vrot.lane.b32.xlu0 %v175, 108
        %v661 = vpop.permute.xlu0 %660
        %662 = vrot.lane.b32.xlu0 %v176, 108
        %v663 = vpop.permute.xlu0 %662
        %v666 = vsel %vm189, %v659, 0
        %668 = vmatprep.subr.mxu0 0.0
        %669 = vmatpush1.msra.mxu0 0.0
        %670 = vmatprep.subr.mxu0 0.0
        %671 = vmatpush1.msra.mxu0 0.0
        %672 = vmatprep.subr.mxu0 0.0
        %673 = vmatpush1.msra.mxu0 0.0
        %674 = vmatprep.subr.mxu0 0.0
        %675 = vmatpush1.msra.mxu0 0.0
        %676 = vmatprep.subr.mxu0 0.0
        %677 = vmatpush1.msra.mxu0 0.0
        %678 = vmatprep.subr.mxu0 0.0
        %679 = vmatpush1.msra.mxu0 0.0
        %680 = vmatprep.subr.mxu0 0.0
        %681 = vmatpush1.msra.mxu0 0.0
        %682 = vmatprep.subr.mxu0 0.0
        %683 = vmatpush1.msra.mxu0 0.0
        %684 = vmatprep.subr.mxu0 0.0
        %685 = vmatpush1.msra.mxu0 0.0
        %686 = vmatprep.subr.mxu0 0.0
        %687 = vmatpush1.msra.mxu0 0.0
        %688 = vmatprep.subr.mxu0 0.0
        %689 = vmatpush1.msra.mxu0 0.0
        %690 = vmatprep.subr.mxu0 0.0
        %691 = vmatpush1.msra.mxu0 0.0
        %692 = vmatprep.subr.mxu0 0.0
        %693 = vmatpush1.msra.mxu0 0.0
        %694 = vmatprep.subr.mxu0 0.0
        %695 = vmatpush1.msra.mxu0 0.0
        %696 = vmatprep.subr.mxu0 0.0
        %697 = vmatpush1.msra.mxu0 %v663
        %698 = vmatprep.subr.mxu0 0.0
        %699 = vmatpush1.msra.mxu0 %v661
        %700 = vmatprep.subr.mxu0 0.0
        %701 = vmatpush2.msra.mxu0 0.0
        %702 = vmatprep.subr.mxu0 0.0
        %703 = vmatpush2.msra.mxu0 0.0
        %704 = vmatprep.subr.mxu0 0.0
        %705 = vmatpush2.msra.mxu0 0.0
        %706 = vmatprep.subr.mxu0 0.0
        %707 = vmatpush2.msra.mxu0 0.0
        %708 = vmatprep.subr.mxu0 0.0
        %709 = vmatpush2.msra.mxu0 0.0
        %710 = vmatprep.subr.mxu0 0.0
        %711 = vmatpush2.msra.mxu0 0.0
        %712 = vmatprep.subr.mxu0 0.0
        %713 = vmatpush2.msra.mxu0 0.0
        %714 = vmatprep.subr.mxu0 0.0
        %715 = vmatpush2.msra.mxu0 0.0
        %716 = vmatprep.subr.mxu0 0.0
        %717 = vmatpush2.msra.mxu0 0.0
        %718 = vmatprep.subr.mxu0 0.0
        %719 = vmatpush2.msra.mxu0 0.0
        %720 = vmatprep.subr.mxu0 0.0
        %721 = vmatpush2.msra.mxu0 0.0
        %722 = vmatprep.subr.mxu0 0.0
        %723 = vmatpush2.msra.mxu0 0.0
        %724 = vmatprep.subr.mxu0 0.0
        %725 = vmatpush2.msra.mxu0 0.0
        %726 = vmatprep.subr.mxu0 0.0
        %727 = vmatpush2.msra.mxu0 0.0
        %728 = vmatprep.subr.mxu0 0.0
        %729 = vmatpush2.msra.mxu0 0.0
        %730 = vmatprep.subr.mxu0 0.0
        %731 = vmatpush2.msra.mxu0 0.0
        %732 = vmatprep.mubr.f32.mxu0 0.0
        %733 = vmatmul.mubr.f32.gmra.mxu0 %v666
        %v734 = vpop.f32.mrf.mxu0
        %v735 = vadd.f32 0.0, %v734
        %v736 = vpop.f32.mrf.mxu0
        %737 = vdwg.mxu0
        %v738 = vadd.f32 %v657, %v735
        %739 = vrot.lane.b32.xlu0 %v177, 16
        %v740 = vpop.permute.xlu0 %739
        %741 = vrot.lane.b32.xlu0 %v175, 107
        %v742 = vpop.permute.xlu0 %741
        %743 = vrot.lane.b32.xlu0 %v176, 107
        %v744 = vpop.permute.xlu0 %743
        %v747 = vsel %vm189, %v740, 0
        %749 = vmatprep.subr.mxu0 0.0
        %750 = vmatpush1.msra.mxu0 0.0
        %751 = vmatprep.subr.mxu0 0.0
        %752 = vmatpush1.msra.mxu0 0.0
        %753 = vmatprep.subr.mxu0 0.0
        %754 = vmatpush1.msra.mxu0 0.0
        %755 = vmatprep.subr.mxu0 0.0
        %756 = vmatpush1.msra.mxu0 0.0
        %757 = vmatprep.subr.mxu0 0.0
        %758 = vmatpush1.msra.mxu0 0.0
        %759 = vmatprep.subr.mxu0 0.0
        %760 = vmatpush1.msra.mxu0 0.0
        %761 = vmatprep.subr.mxu0 0.0
        %762 = vmatpush1.msra.mxu0 0.0
        %763 = vmatprep.subr.mxu0 0.0
        %764 = vmatpush1.msra.mxu0 0.0
        %765 = vmatprep.subr.mxu0 0.0
        %766 = vmatpush1.msra.mxu0 0.0
        %767 = vmatprep.subr.mxu0 0.0
        %768 = vmatpush1.msra.mxu0 0.0
        %769 = vmatprep.subr.mxu0 0.0
        %770 = vmatpush1.msra.mxu0 0.0
        %771 = vmatprep.subr.mxu0 0.0
        %772 = vmatpush1.msra.mxu0 0.0
        %773 = vmatprep.subr.mxu0 0.0
        %774 = vmatpush1.msra.mxu0 0.0
        %775 = vmatprep.subr.mxu0 0.0
        %776 = vmatpush1.msra.mxu0 0.0
        %777 = vmatprep.subr.mxu0 0.0
        %778 = vmatpush1.msra.mxu0 %v744
        %779 = vmatprep.subr.mxu0 0.0
        %780 = vmatpush1.msra.mxu0 %v742
        %781 = vmatprep.subr.mxu0 0.0
        %782 = vmatpush2.msra.mxu0 0.0
        %783 = vmatprep.subr.mxu0 0.0
        %784 = vmatpush2.msra.mxu0 0.0
        %785 = vmatprep.subr.mxu0 0.0
        %786 = vmatpush2.msra.mxu0 0.0
        %787 = vmatprep.subr.mxu0 0.0
        %788 = vmatpush2.msra.mxu0 0.0
        %789 = vmatprep.subr.mxu0 0.0
        %790 = vmatpush2.msra.mxu0 0.0
        %791 = vmatprep.subr.mxu0 0.0
        %792 = vmatpush2.msra.mxu0 0.0
        %793 = vmatprep.subr.mxu0 0.0
        %794 = vmatpush2.msra.mxu0 0.0
        %795 = vmatprep.subr.mxu0 0.0
        %796 = vmatpush2.msra.mxu0 0.0
        %797 = vmatprep.subr.mxu0 0.0
        %798 = vmatpush2.msra.mxu0 0.0
        %799 = vmatprep.subr.mxu0 0.0
        %800 = vmatpush2.msra.mxu0 0.0
        %801 = vmatprep.subr.mxu0 0.0
        %802 = vmatpush2.msra.mxu0 0.0
        %803 = vmatprep.subr.mxu0 0.0
        %804 = vmatpush2.msra.mxu0 0.0
        %805 = vmatprep.subr.mxu0 0.0
        %806 = vmatpush2.msra.mxu0 0.0
        %807 = vmatprep.subr.mxu0 0.0
        %808 = vmatpush2.msra.mxu0 0.0
        %809 = vmatprep.subr.mxu0 0.0
        %810 = vmatpush2.msra.mxu0 0.0
        %811 = vmatprep.subr.mxu0 0.0
        %812 = vmatpush2.msra.mxu0 0.0
        %813 = vmatprep.mubr.f32.mxu0 0.0
        %814 = vmatmul.mubr.f32.gmra.mxu0 %v747
        %v815 = vpop.f32.mrf.mxu0
        %v816 = vadd.f32 0.0, %v815
        %v817 = vpop.f32.mrf.mxu0
        %818 = vdwg.mxu0
        %v819 = vadd.f32 %v738, %v816
        %v820 = vld [vmem:[#allocation5 + $0x8] sm:$0xff]
        %821 = vrot.lane.b32.xlu0 %v175, 106
        %v822 = vpop.permute.xlu0 %821
        %823 = vrot.lane.b32.xlu0 %v176, 106
        %v824 = vpop.permute.xlu0 %823
        %v828 = vsel %vm189, %v820, 0
        %830 = vmatprep.subr.mxu0 0.0
        %831 = vmatpush1.msra.mxu0 0.0
        %832 = vmatprep.subr.mxu0 0.0
        %833 = vmatpush1.msra.mxu0 0.0
        %834 = vmatprep.subr.mxu0 0.0
        %835 = vmatpush1.msra.mxu0 0.0
        %836 = vmatprep.subr.mxu0 0.0
        %837 = vmatpush1.msra.mxu0 0.0
        %838 = vmatprep.subr.mxu0 0.0
        %839 = vmatpush1.msra.mxu0 0.0
        %840 = vmatprep.subr.mxu0 0.0
        %841 = vmatpush1.msra.mxu0 0.0
        %842 = vmatprep.subr.mxu0 0.0
        %843 = vmatpush1.msra.mxu0 0.0
        %844 = vmatprep.subr.mxu0 0.0
        %845 = vmatpush1.msra.mxu0 0.0
        %846 = vmatprep.subr.mxu0 0.0
        %847 = vmatpush1.msra.mxu0 0.0
        %848 = vmatprep.subr.mxu0 0.0
        %849 = vmatpush1.msra.mxu0 0.0
        %850 = vmatprep.subr.mxu0 0.0
        %851 = vmatpush1.msra.mxu0 0.0
        %852 = vmatprep.subr.mxu0 0.0
        %853 = vmatpush1.msra.mxu0 0.0
        %854 = vmatprep.subr.mxu0 0.0
        %855 = vmatpush1.msra.mxu0 0.0
        %856 = vmatprep.subr.mxu0 0.0
        %857 = vmatpush1.msra.mxu0 0.0
        %858 = vmatprep.subr.mxu0 0.0
        %859 = vmatpush1.msra.mxu0 %v824
        %860 = vmatprep.subr.mxu0 0.0
        %861 = vmatpush1.msra.mxu0 %v822
        %862 = vmatprep.subr.mxu0 0.0
        %863 = vmatpush2.msra.mxu0 0.0
        %864 = vmatprep.subr.mxu0 0.0
        %865 = vmatpush2.msra.mxu0 0.0
        %866 = vmatprep.subr.mxu0 0.0
        %867 = vmatpush2.msra.mxu0 0.0
        %868 = vmatprep.subr.mxu0 0.0
        %869 = vmatpush2.msra.mxu0 0.0
        %870 = vmatprep.subr.mxu0 0.0
        %871 = vmatpush2.msra.mxu0 0.0
        %872 = vmatprep.subr.mxu0 0.0
        %873 = vmatpush2.msra.mxu0 0.0
        %874 = vmatprep.subr.mxu0 0.0
        %875 = vmatpush2.msra.mxu0 0.0
        %876 = vmatprep.subr.mxu0 0.0
        %877 = vmatpush2.msra.mxu0 0.0
        %878 = vmatprep.subr.mxu0 0.0
        %879 = vmatpush2.msra.mxu0 0.0
        %880 = vmatprep.subr.mxu0 0.0
        %881 = vmatpush2.msra.mxu0 0.0
        %882 = vmatprep.subr.mxu0 0.0
        %883 = vmatpush2.msra.mxu0 0.0
        %884 = vmatprep.subr.mxu0 0.0
        %885 = vmatpush2.msra.mxu0 0.0
        %886 = vmatprep.subr.mxu0 0.0
        %887 = vmatpush2.msra.mxu0 0.0
        %888 = vmatprep.subr.mxu0 0.0
        %889 = vmatpush2.msra.mxu0 0.0
        %890 = vmatprep.subr.mxu0 0.0
        %891 = vmatpush2.msra.mxu0 0.0
        %892 = vmatprep.subr.mxu0 0.0
        %893 = vmatpush2.msra.mxu0 0.0
        %894 = vmatprep.mubr.f32.mxu0 0.0
        %895 = vmatmul.mubr.f32.gmra.mxu0 %v828
        %v896 = vpop.f32.mrf.mxu0
        %v897 = vadd.f32 0.0, %v896
        %v898 = vpop.f32.mrf.mxu0
        %899 = vdwg.mxu0
        %v900 = vadd.f32 %v819, %v897
        %v901 = vmax.f32 %v900, 0.0
        %vm902 = vcmask 654336
        %903 = vst.msk [vmem:[%s174] sm:$0xff] %vm902, %v901
        %s904 = sand.u32 %s75, 1
        %s905 = scalar_lea.sflag [#allocation4], %s904
        %s906 = sand.u32 %s75, 1
        %s907 = smul.addr %s906, 8
        %s908 = scalar_lea.vmem [#allocation7], %s907
        // Predicated region
        $region37: #{tpu_custom_call.1} parent=27 // pred_check
          %p909 = pneg %p85
        $region38: #{tpu_custom_call.1} parent=27 // pred_check_branch
          %911 = sbr.rel (%p909) target = $region40
        $region39: #{tpu_custom_call.1} parent=27 // pred_region
          %s913 = ssub.s32 128, 128
          %914 = vsyncadd %s905, %s913
          %s915 = smul.addr %s20, 128
          %s916 = scalar_lea.hbm %s2, %s915
          %s918 = sshll.u32 %s908, 4
          %s919 = int_to_ptr.vmem [resolvable:$true] %s918
          %921 = dma.vmem_to_hbm [thread:$0]  %s919, 128, %s916, %s905
        $region40: #{tpu_custom_call.1} parent=27 // pred_fallthru
          _
      $region28: #{tpu_custom_call.1} parent=5 // pred_fallthru
        _
      %p922 = scmp.le.s32.totalorder 2, %s15
      // Predicated region
      $region41: #{tpu_custom_call.1} parent=5 // pred_check
        %p923 = pneg %p922
      $region42: #{tpu_custom_call.1} parent=5 // pred_check_branch
        %925 = sbr.rel (%p923) target = $region44
      $region43: #{tpu_custom_call.1} parent=5 // pred_region
        %s926 = ssub.s32 %s15, 2
        // Predicated region
        $region45: #{tpu_custom_call.1} parent=43 // pred_check
          %p927 = pneg %p91
        $region46: #{tpu_custom_call.1} parent=43 // pred_check_branch
          %929 = sbr.rel (%p927) target = $region48
        $region47: #{tpu_custom_call.1} parent=43 // pred_region
          %s930 = sand.u32 %s76, 1
          %s931 = scalar_lea.sflag [#allocation4], %s930
          %s932 = sand.u32 %s76, 1
          %s933 = smul.addr %s932, 8
          %s934 = scalar_lea.vmem [#allocation7], %s933
          %935 = dma.done %s931, 128
        $region48: #{tpu_custom_call.1} parent=43 // pred_fallthru
          _
      $region44: #{tpu_custom_call.1} parent=5 // pred_fallthru
        _
    $region6: #{tpu_custom_call.1} parent=1 // loop_footer
      %s19 = sadd.s32 1, %s15
    $region7: #{tpu_custom_call.1} parent=1 // loop_footer_branch
      %14 = sbr.rel target = $region3
    $region8: #{tpu_custom_call.1} parent=1 // loop_exit
      _
    %936 = vsyncpa [#allocation3], 1
    %s937 = scalar_lea.sflag [#allocation3], 1
    %938 = vsyncpa %s937, 1
    %939 = vsyncpa [#allocation6], 1
    %940 = vsyncpa [#allocation4], 1
    %s941 = scalar_lea.sflag [#allocation4], 1
    %942 = vsyncpa %s941, 1

</llo_original>
